<compile_context>
chip_gen: v7x
topology: tpu7x:2x2x1
jax: 0.10.0
libtpu: 0.0.40
codegen_flags: <defaults>
</compile_context>

<pallas_src>
import functools

import jax
import jax.numpy as jnp
from jax.experimental import pallas as pl
from jax.experimental.pallas import tpu as pltpu


# ---------------------------------------------------------------------------
# Helpers
# ---------------------------------------------------------------------------
def _round_up(x, m):
    return (x + m - 1) // m * m


def _default_vmem_limit_bytes():
    """Per-generation scoped-VMEM request: 3/4 of physical, capped at 100 MiB.

    v5e/v6e (128 MiB physical) -> 96 MiB; v7x (64 MiB physical) -> 48 MiB.
    Falls back to 48 MiB if the hardware query is unavailable.
    """
    cap = 64 * 1024 * 1024
    try:
        info = pltpu.get_tpu_info()
        cap = int(getattr(info, "vmem_capacity_bytes", cap) or cap)
    except Exception:
        pass
    return max(32 * 1024 * 1024, min(100 * 1024 * 1024, (cap * 3) // 4))


_VMEM_LIMIT_BYTES = _default_vmem_limit_bytes()

_SINGLE_SWEEP_CAP = 2048   # contraction handled in one K sweep below this
_TK = 1024                 # K tile when a K grid axis is actually needed
_TM = 512                  # row tile (multiple of 16: clean bf16 sublane pack)
_TN = 512                  # column tile cap (>= typical F_out, multiple of 128)


# ---------------------------------------------------------------------------
# Kernel: out = a @ b (+ bias); in-kernel bf16 cast for the MXU, f32 acc.
# ---------------------------------------------------------------------------
def _mm_kernel(*refs, tk, mxu_dtype, has_bias, has_k_axis, b_resident):
    if has_k_axis:
        if has_bias:
            a_ref, b_ref, bias_ref, o_ref, acc_ref = refs
        else:
            a_ref, b_ref, o_ref, acc_ref = refs
            bias_ref = None

        kidx = pl.program_id(2)

        @pl.when(kidx == 0)
        def _():
            acc_ref[...] = jnp.zeros_like(acc_ref)

        a = a_ref[...].astype(mxu_dtype)
        if b_resident:
            # b holds the full-K column slab; slice the current K tile in VMEM.
            koff = pl.multiple_of(kidx * tk, tk)
            b = b_ref[pl.ds(koff, tk), :].astype(mxu_dtype)
        else:
            b = b_ref[...].astype(mxu_dtype)
        acc_ref[...] += jnp.dot(a, b, preferred_element_type=jnp.float32)

        @pl.when(kidx == pl.num_programs(2) - 1)
        def _():
            out = acc_ref[...]
            if has_bias:
                out = out + bias_ref[...].astype(jnp.float32)
            o_ref[...] = out.astype(o_ref.dtype)
    else:
        if has_bias:
            a_ref, b_ref, bias_ref, o_ref = refs
        else:
            a_ref, b_ref, o_ref = refs
            bias_ref = None
        out = jnp.dot(a_ref[...].astype(mxu_dtype), b_ref[...].astype(mxu_dtype),
                      preferred_element_type=jnp.float32)
        if has_bias:
            out = out + bias_ref[...].astype(jnp.float32)
        o_ref[...] = out.astype(o_ref.dtype)


# ---------------------------------------------------------------------------
# Tiled matmul wrapper.
# ---------------------------------------------------------------------------
def _gcn_matmul(a, b, bias=None, *, out_dtype, mxu_dtype=jnp.bfloat16,
                tm=_TM, tk=_TK, tk_single_sweep_cap=_SINGLE_SWEEP_CAP, tn=_TN,
                vmem_limit_bytes=_VMEM_LIMIT_BYTES):
    """out = a @ b (+ bias), tiled for the TPU MXU.

    a: [M, K] (streamed, cast to bf16 in-kernel), b: [K, N] (VMEM K-resident
    when it fits), bias: [N] or None.  Returns [M, N] in out_dtype.
    """
    m, k = a.shape
    k2, n = b.shape
    assert k == k2, (a.shape, b.shape)
    out_itemsize = jnp.dtype(out_dtype).itemsize

    # --- tile sizes ---------------------------------------------------------
    tm_eff = tm if m > tm else m          # full-dim block when small
    tn_eff = tn if n > tn else n          # keep full F_out in one lane-dense tile

    if k <= tk_single_sweep_cap:
        tk_eff, kp, gk = k, k, 1          # single K sweep, no accumulator RMW
    else:
        tk_eff = tk
        kp = _round_up(k, tk_eff)
        gk = kp // tk_eff
        if kp != k:
            # Correctness fallback only; gcn_layer pre-pads so this stays
            # dormant for the dominant adjacency / support operands.
            a = jnp.pad(a, ((0, 0), (0, kp - k)))
            b = jnp.pad(b, ((0, kp - k), (0, 0)))

    gm = pl.cdiv(m, tm_eff)
    gn = pl.cdiv(n, tn_eff)

    # --- can the full-K column slab of b stay resident in VMEM? --------------
    a_tile_bytes = 2 * tm_eff * tk_eff * a.dtype.itemsize       # double-buffered
    b_slab_bytes = 2 * kp * tn_eff * b.dtype.itemsize           # double-buffered
    o_tile_bytes = 2 * tm_eff * tn_eff * out_itemsize
    acc_bytes = tm_eff * tn_eff * 4
    b_resident = (a_tile_bytes + b_slab_bytes + o_tile_bytes + acc_bytes
                  <= int(0.9 * vmem_limit_bytes))

    has_bias = bias is not None
    has_k_axis = gk > 1

    # --- grid & specs --------------------------------------------------------
    # Column axis OUTERMOST so the resident b slab is DMA'd once per column
    # tile (i.e. b read from HBM exactly once when gn == 1, the common case).
    if has_k_axis:
        grid = (gn, gm, gk)
        a_spec = pl.BlockSpec((tm_eff, tk_eff), lambda j, i, kk: (i, kk))
        if b_resident:
            b_spec = pl.BlockSpec((kp, tn_eff), lambda j, i, kk: (0, j))
        else:
            b_spec = pl.BlockSpec((tk_eff, tn_eff), lambda j, i, kk: (kk, j))
        o_spec = pl.BlockSpec((tm_eff, tn_eff), lambda j, i, kk: (i, j))
        bias_spec = pl.BlockSpec((1, tn_eff), lambda j, i, kk: (0, j))
        scratch_shapes = [pltpu.VMEM((tm_eff, tn_eff), jnp.float32)]
        dim_sem = ("parallel", "parallel", "arbitrary")
    else:
        grid = (gn, gm)
        a_spec = pl.BlockSpec((tm_eff, kp), lambda j, i: (i, 0))
        b_spec = pl.BlockSpec((kp, tn_eff), lambda j, i: (0, j))
        o_spec = pl.BlockSpec((tm_eff, tn_eff), lambda j, i: (i, j))
        bias_spec = pl.BlockSpec((1, tn_eff), lambda j, i: (0, j))
        scratch_shapes = []
        dim_sem = ("parallel", "parallel")
        b_resident = True

    in_specs = [a_spec, b_spec]
    inputs = [a, b]
    if has_bias:
        in_specs.append(bias_spec)
        inputs.append(bias.astype(jnp.float32).reshape(1, -1))

    # --- cost estimate with true HBM re-read factors -------------------------
    bytes_a = gn * m * kp * a.dtype.itemsize
    if b_resident:
        bytes_b = gn * kp * tn_eff * b.dtype.itemsize
    else:
        bytes_b = gm * gn * kp * tn_eff * b.dtype.itemsize
    bytes_o = m * n * out_itemsize
    cost = pl.CostEstimate(flops=2 * m * kp * n, transcendentals=0,
                           bytes_accessed=int(bytes_a + bytes_b + bytes_o))

    kernel = functools.partial(_mm_kernel, tk=tk_eff, mxu_dtype=mxu_dtype,
                               has_bias=has_bias, has_k_axis=has_k_axis,
                               b_resident=b_resident)

    return pl.pallas_call(
        kernel,
        out_shape=jax.ShapeDtypeStruct((m, n), out_dtype),
        grid_spec=pltpu.PrefetchScalarGridSpec(
            num_scalar_prefetch=0,
            grid=grid,
            in_specs=in_specs,
            out_specs=o_spec,
            scratch_shapes=scratch_shapes,
        ),
        compiler_params=pltpu.CompilerParams(
            dimension_semantics=dim_sem,
            vmem_limit_bytes=vmem_limit_bytes,
        ),
        cost_estimate=cost,
    )(*inputs)


# ---------------------------------------------------------------------------
# GCN layer: adj @ (x @ W) [+ bias]
# ---------------------------------------------------------------------------
@functools.partial(jax.jit, static_argnames=("out_dtype",))
def gcn_layer(x, weight, adj, bias=None, *, out_dtype=None):
    """Pallas GCN layer forward.

    x:      [N, F_in]   (float32)
    weight: [F_in, F_out]
    adj:    [N, N]      (dense normalized adjacency)
    bias:   [F_out] or None
    out_dtype: None -> x.dtype (matches PyTorch); set to bf16 to halve the
               output writeback / next layer's input read on mem-bound paths.
    """
    n_nodes = x.shape[0]
    out_dtype = x.dtype if out_dtype is None else out_dtype

    # K-padding plan for the second (adj @ support) matmul.  Only needed when
    # N is large AND not a multiple of the K tile; in that case pad x's rows
    # (cheap, N x F_in) so the support produced by call 1 is already padded
    # with real zeros -- no slice / re-pad pass over support.
    if n_nodes <= _SINGLE_SWEEP_CAP or n_nodes % _TK == 0:
        kp2 = n_nodes
    else:
        kp2 = _round_up(n_nodes, _TK)
    x_in = x if kp2 == n_nodes else jnp.pad(x, ((0, kp2 - n_nodes), (0, 0)))

    # support = x @ W.  W is tiny -> whole-matrix VMEM resident, single K
    # sweep, x streamed once in f32 and cast in-kernel.  Emitted in bf16 so
    # the HBM-bound second matmul streams half the bytes.
    support = _gcn_matmul(x_in, weight, out_dtype=jnp.bfloat16)

    # output = adj @ support (+ bias).  support stays K-resident in VMEM and
    # is read from HBM once; adj (the dominant stream) is read once as f32
    # and cast to bf16 inside the kernel -- no XLA-side adj copies.
    # TODO(synk): for multi-layer models, pre-cast (and pre-pad) adj to bf16
    #             once at model setup to halve the adjacency stream again, or
    #             fuse both matmuls into one pallas_call when N*F_out*2 bytes
    #             fits the generation's VMEM budget.
    adj_in = adj if kp2 == n_nodes else jnp.pad(adj, ((0, 0), (0, kp2 - n_nodes)))
    out = _gcn_matmul(adj_in, support, bias=bias, out_dtype=out_dtype)

    # TODO(synk): BatchNorm1d branch (batch_norm=True) not implemented since
    #             the module default disables it.
    return out


# ---------------------------------------------------------------------------
# Reference / init helpers
# ---------------------------------------------------------------------------
def xavier_uniform(key, shape, dtype=jnp.float32):
    """Matches torch.nn.init.xavier_uniform_ for a 2D weight [fan_in, fan_out]."""
    fan_in, fan_out = shape
    limit = (6.0 / (fan_in + fan_out)) ** 0.5
    return jax.random.uniform(key, shape, dtype, minval=-limit, maxval=limit)


def _ref_gcn(x, weight, adj, bias=None):
    """Pure-JAX reference mirroring the kernel's bf16-MXU / f32-acc path."""
    bf = jnp.bfloat16
    support = jnp.dot(x.astype(bf), weight.astype(bf),
                      preferred_element_type=jnp.float32).astype(bf)
    out = jnp.dot(adj.astype(bf), support, preferred_element_type=jnp.float32)
    if bias is not None:
        out = out + bias.astype(jnp.float32)
    return out.astype(x.dtype)


if __name__ == "__main__":
    key = jax.random.PRNGKey(0)
    k_x, k_w, k_a, k_b = jax.random.split(key, 4)

    N, F_IN, F_OUT = 16, 32, 32  # small node graph, hidden sizes

    x = jax.random.normal(k_x, (N, F_IN), dtype=jnp.float32)
    weight = xavier_uniform(k_w, (F_IN, F_OUT))
    # Simple symmetric normalized-ish adjacency (dense, deterministic).
    a_raw = jax.random.uniform(k_a, (N, N), dtype=jnp.float32)
    adj = (a_raw + a_raw.T) * 0.5 / N

    # Module defaults: bias=False, batch_norm=False.
    out = jax.block_until_ready(gcn_layer(x, weight, adj))
    ref = _ref_gcn(x, weight, adj)
    assert out.shape == (N, F_OUT)
    assert jnp.allclose(out, ref, atol=1e-2, rtol=1e-2), \
        float(jnp.max(jnp.abs(out - ref)))

    # Optional bias path (module supports bias=True).
    bias = jax.random.uniform(k_b, (F_OUT,), jnp.float32, minval=-0.1, maxval=0.1)
    out_b = jax.block_until_ready(gcn_layer(x, weight, adj, bias=bias))
    ref_b = _ref_gcn(x, weight, adj, bias=bias)
    assert jnp.allclose(out_b, ref_b, atol=1e-2, rtol=1e-2), \
        float(jnp.max(jnp.abs(out_b - ref_b)))

    print("KERNEL_OK")
</pallas_src>

<mosaic_0001>
module attributes {stable_mosaic.version = 11 : i64} {
  func.func @_mm_kernel(%arg0: i32, %arg1: i32, %arg2: memref<16x32xf32, #tpu.memory_space<vmem>>, %arg3: memref<32x32xf32, #tpu.memory_space<vmem>>, %arg4: memref<16x32xbf16, #tpu.memory_space<vmem>>) attributes {dimension_semantics = [#tpu.dimension_semantics<parallel>, #tpu.dimension_semantics<parallel>], iteration_bounds = array<i64: 1, 1>, scalar_prefetch = 0 : i64, scratch_operands = 0 : i64, tpu.core_type = #tpu.core_type<tc>, window_params = [{transform_indices = @transform_0, window_bounds = array<i64: 16, 32>}, {transform_indices = @transform_1, window_bounds = array<i64: 32, 32>}, {transform_indices = @transform_2, window_bounds = array<i64: 16, 32>}]} {
    %c0 = arith.constant 0 : index
    %c0_0 = arith.constant 0 : index
    %0 = vector.load %arg2[%c0, %c0_0] : memref<16x32xf32, #tpu.memory_space<vmem>>, vector<16x32xf32>
    %1 = arith.truncf %0 : vector<16x32xf32> to vector<16x32xbf16>
    %c0_1 = arith.constant 0 : index
    %c0_2 = arith.constant 0 : index
    %2 = vector.load %arg3[%c0_1, %c0_2] : memref<32x32xf32, #tpu.memory_space<vmem>>, vector<32x32xf32>
    %3 = arith.truncf %2 : vector<32x32xf32> to vector<32x32xbf16>
    %cst = arith.constant dense<0.000000e+00> : vector<16x32xf32>
    %4 = tpu.matmul %1, %3, %cst {dimension_numbers = #tpu.dot_dimension_numbers<[1], [0], [0], [1], [0, 0, 1, 1], [], []>} : vector<16x32xbf16>, vector<32x32xbf16>, vector<16x32xf32> -> vector<16x32xf32>
    %5 = arith.truncf %4 : vector<16x32xf32> to vector<16x32xbf16>
    %c0_3 = arith.constant 0 : index
    %c0_4 = arith.constant 0 : index
    %6 = vector.load %arg4[%c0_3, %c0_4] : memref<16x32xbf16, #tpu.memory_space<vmem>>, vector<16x32xbf16>
    tpu.vector_store %arg4[%c0_3, %c0_4], %5 {strides = array<i32>} : memref<16x32xbf16, #tpu.memory_space<vmem>>, vector<16x32xbf16>,
    return
  }
  func.func @transform_0(%arg0: i32, %arg1: i32) -> (i32, i32) {
    %c0_i32 = arith.constant 0 : i32
    %c0_i32_0 = arith.constant 0 : i32
    return %arg1, %c0_i32 : i32, i32
  }
  func.func @transform_1(%arg0: i32, %arg1: i32) -> (i32, i32) {
    %c0_i32 = arith.constant 0 : i32
    %c0_i32_0 = arith.constant 0 : i32
    return %c0_i32, %arg0 : i32, i32
  }
  func.func @transform_2(%arg0: i32, %arg1: i32) -> (i32, i32) {
    %c0_i32 = arith.constant 0 : i32
    return %arg1, %arg0 : i32, i32
  }
}

module attributes {stable_mosaic.version = 11 : i64} {
  func.func @_mm_kernel(%arg0: i32, %arg1: i32, %arg2: memref<16x16xf32, #tpu.memory_space<vmem>>, %arg3: memref<16x32xbf16, #tpu.memory_space<vmem>>, %arg4: memref<16x32xf32, #tpu.memory_space<vmem>>) attributes {dimension_semantics = [#tpu.dimension_semantics<parallel>, #tpu.dimension_semantics<parallel>], iteration_bounds = array<i64: 1, 1>, scalar_prefetch = 0 : i64, scratch_operands = 0 : i64, tpu.core_type = #tpu.core_type<tc>, window_params = [{transform_indices = @transform_0, window_bounds = array<i64: 16, 16>}, {transform_indices = @transform_1, window_bounds = array<i64: 16, 32>}, {transform_indices = @transform_2, window_bounds = array<i64: 16, 32>}]} {
    %c0 = arith.constant 0 : index
    %c0_0 = arith.constant 0 : index
    %0 = vector.load %arg2[%c0, %c0_0] : memref<16x16xf32, #tpu.memory_space<vmem>>, vector<16x16xf32>
    %1 = arith.truncf %0 : vector<16x16xf32> to vector<16x16xbf16>
    %c0_1 = arith.constant 0 : index
    %c0_2 = arith.constant 0 : index
    %2 = vector.load %arg3[%c0_1, %c0_2] : memref<16x32xbf16, #tpu.memory_space<vmem>>, vector<16x32xbf16>
    %cst = arith.constant dense<0.000000e+00> : vector<16x32xf32>
    %3 = tpu.matmul %1, %2, %cst {dimension_numbers = #tpu.dot_dimension_numbers<[1], [0], [0], [1], [0, 0, 1, 1], [], []>} : vector<16x16xbf16>, vector<16x32xbf16>, vector<16x32xf32> -> vector<16x32xf32>
    %c0_3 = arith.constant 0 : index
    %c0_4 = arith.constant 0 : index
    %4 = vector.load %arg4[%c0_3, %c0_4] : memref<16x32xf32, #tpu.memory_space<vmem>>, vector<16x32xf32>
    tpu.vector_store %arg4[%c0_3, %c0_4], %3 {strides = array<i32>} : memref<16x32xf32, #tpu.memory_space<vmem>>, vector<16x32xf32>,
    return
  }
  func.func @transform_0(%arg0: i32, %arg1: i32) -> (i32, i32) {
    %c0_i32 = arith.constant 0 : i32
    %c0_i32_0 = arith.constant 0 : i32
    return %arg1, %c0_i32 : i32, i32
  }
  func.func @transform_1(%arg0: i32, %arg1: i32) -> (i32, i32) {
    %c0_i32 = arith.constant 0 : i32
    %c0_i32_0 = arith.constant 0 : i32
    return %c0_i32, %arg0 : i32, i32
  }
  func.func @transform_2(%arg0: i32, %arg1: i32) -> (i32, i32) {
    %c0_i32 = arith.constant 0 : i32
    return %arg1, %arg0 : i32, i32
  }
}

</mosaic_0001>

<llo_original>
// kernel: gcn_layer.3
$region0: #{gcn_layer.3}
  #allocation0 [shape = 'u32[]', space=smem, size = 0x4, offset = 0x4, fixed_abs, tag = 'smem constant byte address 0x4 - core index']
  #allocation1 [shape = 'u32[144,128]{1,0:T(1,128)}', space=vmem, size = 0x12000, scoped, tag = 'internal scratch']
  %s0 = inlined_call_operand.vmem [shape: f32[16,16], index: 0, kind: input, shape index: {}]
  %s1 = inlined_call_operand.vmem [shape: bf16[16,32], index: 1, kind: input, shape index: {}]
  %s2 = inlined_call_operand.hbm [shape: f32[16,32], index: 2, kind: output, shape index: {}]
  %s3 = sld [smem:[#allocation0]]
  $region18: #{gcn_layer.3} parent=0
    _
  %s5 = ssub.s32 1, %s3
  %s6 = scalar_select 0, %s5, %s3
  $region1: #{gcn_layer.3} parent=0
    #allocation2 [shape = 'u8[8192]{0}', space=vmem, size = 0x2000, scoped, tag = 'output window, operand 0, single buffered']
    #allocation3 [shape = 's32[1]{0}', space=sflag, size = 0x4, scoped, tag = 'scoped memory for gcn_layer.3']
    %7 = vsyncpa [#allocation3], 0
    // Predicated region
    $region2: #{gcn_layer.3} parent=1 // pred_check
      _
    $region3: #{gcn_layer.3} parent=1 // pred_check_branch
      %9 = sbr.rel (0) target = $region5
    $region4: #{gcn_layer.3} parent=1 // pred_region
      _
    $region5: #{gcn_layer.3} parent=1 // pred_fallthru
      _
    // Predicated region
    $region6: #{gcn_layer.3} parent=1 // pred_check
      _
    $region7: #{gcn_layer.3} parent=1 // pred_check_branch
      %11 = sbr.rel (0) target = $region9
    $region8: #{gcn_layer.3} parent=1 // pred_region
      _
    $region9: #{gcn_layer.3} parent=1 // pred_fallthru
      _
    %v13 = vld [vmem:[%s0] sm:$0xff]
    %v14 = vld [vmem:[%s0 + $0x8] sm:$0xff]
    %v15 = vpack.c.bf16 %v14, %v13
    %v16 = vld [vmem:[%s1] sm:$0xf]
    %v17 = vld [vmem:[%s1 + $0x4] sm:$0xf]
    %v20 = vunpack.c.l.b16 %v16
    %v21 = vunpack.c.l.b16 %v17
    %v22 = vpack.c.b16 %v21, %v20
    %vm24 = vcmask 130048
    %v26 = vsel %vm24, %v15, 0
    %28 = vmatprep.subr.bf16.mxu0 0
    %29 = vmatpush1.bf16.msra.mxu0 %v22
    %30 = vmatprep.subr.bf16.mxu0 0
    %31 = vmatpush1.bf16.msra.mxu0 0
    %32 = vmatprep.subr.bf16.mxu0 0
    %33 = vmatpush1.bf16.msra.mxu0 0
    %34 = vmatprep.subr.bf16.mxu0 0
    %35 = vmatpush1.bf16.msra.mxu0 0
    %36 = vmatprep.subr.bf16.mxu0 0
    %37 = vmatpush1.bf16.msra.mxu0 0
    %38 = vmatprep.subr.bf16.mxu0 0
    %39 = vmatpush1.bf16.msra.mxu0 0
    %40 = vmatprep.subr.bf16.mxu0 0
    %41 = vmatpush1.bf16.msra.mxu0 0
    %42 = vmatprep.subr.bf16.mxu0 0
    %43 = vmatpush1.bf16.msra.mxu0 0
    %44 = vmatprep.subr.bf16.mxu0 0
    %45 = vmatpush1.bf16.msra.mxu0 0
    %46 = vmatprep.subr.bf16.mxu0 0
    %47 = vmatpush1.bf16.msra.mxu0 0
    %48 = vmatprep.subr.bf16.mxu0 0
    %49 = vmatpush1.bf16.msra.mxu0 0
    %50 = vmatprep.subr.bf16.mxu0 0
    %51 = vmatpush1.bf16.msra.mxu0 0
    %52 = vmatprep.subr.bf16.mxu0 0
    %53 = vmatpush1.bf16.msra.mxu0 0
    %54 = vmatprep.subr.bf16.mxu0 0
    %55 = vmatpush1.bf16.msra.mxu0 0
    %56 = vmatprep.subr.bf16.mxu0 0
    %57 = vmatpush1.bf16.msra.mxu0 0
    %58 = vmatprep.subr.bf16.mxu0 0
    %59 = vmatpush1.bf16.msra.mxu0 0
    %60 = vmatprep.mubr.bf16.mxu0 0
    %61 = vmatmul.mubr.bf16.gmra.mrb[0].mxu0 %v26
    %v62 = vpop.f32.mrb[0].mxu0
    %v63 = vadd.f32 0.0, %v62
    %v64 = vpop.f32.mrb[0].mxu0
    %v65 = vpop.f32.mrb[0].mxu0
    %v66 = vadd.f32 0.0, %v65
    %v67 = vpop.f32.mrb[0].mxu0
    %68 = vdwg.mxu0
    %vm69 = vcmask 261120
    %70 = vst.msk [vmem:[#allocation2] sm:$0xff] %vm69, %v63
    %71 = vst.msk [vmem:[#allocation2 + $0x8] sm:$0xff] %vm69, %v66
    // Predicated region
    $region10: #{gcn_layer.3} parent=1 // pred_check
      _
    $region11: #{gcn_layer.3} parent=1 // pred_check_branch
      %73 = sbr.rel (0) target = $region13
    $region12: #{gcn_layer.3} parent=1 // pred_region
      %s75 = ssub.s32 256, 256
      %76 = vsyncadd [#allocation3], %s75
      %s77 = sshll.u32 [#allocation2], 4
      %s78 = int_to_ptr.vmem [resolvable:$true] %s77
      %83 = dma.vmem_to_hbm [thread:$0]  %s78, 256, %s2, [#allocation3], 128, 128, 8
    $region13: #{gcn_layer.3} parent=1 // pred_fallthru
      _
    // Predicated region
    $region14: #{gcn_layer.3} parent=1 // pred_check
      _
    $region15: #{gcn_layer.3} parent=1 // pred_check_branch
      %85 = sbr.rel (0) target = $region17
    $region16: #{gcn_layer.3} parent=1 // pred_region
      %86 = dma.done [#allocation3], 256
    $region17: #{gcn_layer.3} parent=1 // pred_fallthru
      _
    %87 = vsyncpa [#allocation3], 1

// kernel: gcn_layer.2
$region0: #{gcn_layer.2}
  #allocation0 [shape = 'u32[]', space=smem, size = 0x4, offset = 0x4, fixed_abs, tag = 'smem constant byte address 0x4 - core index']
  #allocation1 [shape = 'u32[144,128]{1,0:T(1,128)}', space=vmem, size = 0x12000, scoped, tag = 'internal scratch']
  %s0 = inlined_call_operand.hbm [shape: f32[16,32], index: 0, kind: input, shape index: {}]
  %s1 = inlined_call_operand.hbm [shape: f32[32,32], index: 1, kind: input, shape index: {}]
  %s2 = inlined_call_operand.vmem [shape: bf16[16,32], index: 2, kind: output, shape index: {}]
  %s3 = sld [smem:[#allocation0]]
  $region26: #{gcn_layer.2} parent=0
    _
  %s5 = ssub.s32 1, %s3
  %s6 = scalar_select 0, %s5, %s3
  $region1: #{gcn_layer.2} parent=0
    #allocation2 [shape = 'u8[8192]{0}', space=vmem, size = 0x2000, scoped, tag = 'input window, operand 0, single buffered']
    #allocation3 [shape = 's32[1]{0}', space=sflag, size = 0x4, scoped, tag = 'scoped memory for gcn_layer.2']
    #allocation4 [shape = 'u8[16384]{0}', space=vmem, size = 0x4000, scoped, tag = 'input window, operand 1, single buffered']
    #allocation5 [shape = 's32[1]{0}', space=sflag, size = 0x4, scoped, tag = 'scoped memory for gcn_layer.2']
    %7 = vsyncpa [#allocation3], 0
    %8 = vsyncpa [#allocation5], 0
    // Predicated region
    $region2: #{gcn_layer.2} parent=1 // pred_check
      _
    $region3: #{gcn_layer.2} parent=1 // pred_check_branch
      %10 = sbr.rel (0) target = $region5
    $region4: #{gcn_layer.2} parent=1 // pred_region
      %s12 = ssub.s32 256, 256
      %13 = vsyncadd [#allocation3], %s12
      %s14 = sshll.u32 [#allocation2], 4
      %s15 = int_to_ptr.vmem [resolvable:$true] %s14
      %20 = dma.hbm_to_vmem [thread:$0]  %s0, 256, %s15, [#allocation3], 128, 128, 8
    $region5: #{gcn_layer.2} parent=1 // pred_fallthru
      _
    // Predicated region
    $region6: #{gcn_layer.2} parent=1 // pred_check
      _
    $region7: #{gcn_layer.2} parent=1 // pred_check_branch
      %22 = sbr.rel (0) target = $region9
    $region8: #{gcn_layer.2} parent=1 // pred_region
      %s24 = ssub.s32 512, 512
      %25 = vsyncadd [#allocation5], %s24
      %s26 = sshll.u32 [#allocation4], 4
      %s27 = int_to_ptr.vmem [resolvable:$true] %s26
      %32 = dma.hbm_to_vmem [thread:$0]  %s1, 512, %s27, [#allocation5], 128, 128, 8
    $region9: #{gcn_layer.2} parent=1 // pred_fallthru
      _
    // Predicated region
    $region10: #{gcn_layer.2} parent=1 // pred_check
      _
    $region11: #{gcn_layer.2} parent=1 // pred_check_branch
      %34 = sbr.rel (0) target = $region13
    $region12: #{gcn_layer.2} parent=1 // pred_region
      %35 = dma.done [#allocation3], 256
    $region13: #{gcn_layer.2} parent=1 // pred_fallthru
      _
    // Predicated region
    $region14: #{gcn_layer.2} parent=1 // pred_check
      _
    $region15: #{gcn_layer.2} parent=1 // pred_check_branch
      %37 = sbr.rel (0) target = $region17
    $region16: #{gcn_layer.2} parent=1 // pred_region
      %38 = dma.done [#allocation5], 512
    $region17: #{gcn_layer.2} parent=1 // pred_fallthru
      _
    %v40 = vld [vmem:[#allocation2] sm:$0xff]
    %v41 = vld [vmem:[#allocation2 + $0x8] sm:$0xff]
    %v42 = vpack.c.bf16 %v41, %v40
    %v43 = vld [vmem:[#allocation4] sm:$0xff]
    %v44 = vld [vmem:[#allocation4 + $0x8] sm:$0xff]
    %v45 = vld [vmem:[#allocation4 + $0x10] sm:$0xff]
    %v46 = vld [vmem:[#allocation4 + $0x18] sm:$0xff]
    %v47 = vpack.c.bf16 %v44, %v43
    %v48 = vpack.c.bf16 %v46, %v45
    %vm49 = vcmask 261120
    %v51 = vsel %vm49, %v42, 0
    %53 = vmatprep.subr.bf16.mxu0 0
    %54 = vmatpush1.bf16.msra.mxu0 %v47
    %55 = vmatprep.subr.bf16.mxu0 0
    %56 = vmatpush1.bf16.msra.mxu0 %v48
    %57 = vmatprep.subr.bf16.mxu0 0
    %58 = vmatpush1.bf16.msra.mxu0 0
    %59 = vmatprep.subr.bf16.mxu0 0
    %60 = vmatpush1.bf16.msra.mxu0 0
    %61 = vmatprep.subr.bf16.mxu0 0
    %62 = vmatpush1.bf16.msra.mxu0 0
    %63 = vmatprep.subr.bf16.mxu0 0
    %64 = vmatpush1.bf16.msra.mxu0 0
    %65 = vmatprep.subr.bf16.mxu0 0
    %66 = vmatpush1.bf16.msra.mxu0 0
    %67 = vmatprep.subr.bf16.mxu0 0
    %68 = vmatpush1.bf16.msra.mxu0 0
    %69 = vmatprep.subr.bf16.mxu0 0
    %70 = vmatpush1.bf16.msra.mxu0 0
    %71 = vmatprep.subr.bf16.mxu0 0
    %72 = vmatpush1.bf16.msra.mxu0 0
    %73 = vmatprep.subr.bf16.mxu0 0
    %74 = vmatpush1.bf16.msra.mxu0 0
    %75 = vmatprep.subr.bf16.mxu0 0
    %76 = vmatpush1.bf16.msra.mxu0 0
    %77 = vmatprep.subr.bf16.mxu0 0
    %78 = vmatpush1.bf16.msra.mxu0 0
    %79 = vmatprep.subr.bf16.mxu0 0
    %80 = vmatpush1.bf16.msra.mxu0 0
    %81 = vmatprep.subr.bf16.mxu0 0
    %82 = vmatpush1.bf16.msra.mxu0 0
    %83 = vmatprep.subr.bf16.mxu0 0
    %84 = vmatpush1.bf16.msra.mxu0 0
    %85 = vmatprep.mubr.bf16.mxu0 0
    %86 = vmatmul.mubr.bf16.gmra.mrb[0].mxu0 %v51
    %v87 = vpop.f32.mrb[0].mxu0
    %v88 = vadd.f32 0.0, %v87
    %v89 = vpop.f32.mrb[0].mxu0
    %v90 = vpop.f32.mrb[0].mxu0
    %v91 = vadd.f32 0.0, %v90
    %v92 = vpop.f32.mrb[0].mxu0
    %93 = vdwg.mxu0
    %v94 = vpack.c.bf16 %v91, %v88
    %v96 = vunpack.c.l.b16 %v94
    %v97 = vunpack.c.h.b16 %v94
    %v98 = vpack.c.b16 %v96, %v96
    %v99 = vpack.c.b16 %v97, %v97
    %vm102 = vcmask 257024
    %103 = vst.msk [vmem:[%s2] sm:$0xf] %vm102, %v98
    %104 = vst.msk [vmem:[%s2 + $0x4] sm:$0xf] %vm102, %v99
    // Predicated region
    $region18: #{gcn_layer.2} parent=1 // pred_check
      _
    $region19: #{gcn_layer.2} parent=1 // pred_check_branch
      %106 = sbr.rel (0) target = $region21
    $region20: #{gcn_layer.2} parent=1 // pred_region
      _
    $region21: #{gcn_layer.2} parent=1 // pred_fallthru
      _
    // Predicated region
    $region22: #{gcn_layer.2} parent=1 // pred_check
      _
    $region23: #{gcn_layer.2} parent=1 // pred_check_branch
      %108 = sbr.rel (0) target = $region25
    $region24: #{gcn_layer.2} parent=1 // pred_region
      _
    $region25: #{gcn_layer.2} parent=1 // pred_fallthru
      _
    %109 = vsyncpa [#allocation3], 1
    %110 = vsyncpa [#allocation5], 1

</llo_original>
